<compile_context>
chip_gen: v6e
topology: v6e:2x2x1
jax: 0.10.0
libtpu: 0.0.40
codegen_flags: <defaults>
</compile_context>

<pallas_src>
import jax
import jax.numpy as jnp
from jax import lax
from jax.experimental import pallas as pl
from jax.experimental.pallas import tpu as pltpu


def _sobel_gram_softmax_kernel(cols_ref, w_ref, out_ref, acc_ref):
    # cols_ref: (1, 9*C, tile_hw) bf16 -- im2col slab tile for one batch element
    # w_ref:    (2*O, 9*C)        bf16 -- rows [wx; wy], columns tap-major then channel
    # out_ref:  (B, O, O)         f32  -- resident output block (same block every step)
    # acc_ref:  (2*O, 2*O)        f32  -- VMEM Gram accumulator over spatial tiles
    b = pl.program_id(0)
    t = pl.program_id(1)
    n_t = pl.num_programs(1)
    O = out_ref.shape[1]

    @pl.when(t == 0)
    def _():
        acc_ref[...] = jnp.zeros_like(acc_ref)

    # Single MXU matmul: both Sobel responses at once, f32 accumulation.
    s = jnp.dot(w_ref[...], cols_ref[0],
                preferred_element_type=jnp.float32)          # (2*O, tile_hw) f32
    s = jnp.abs(s)                                           # f32 elementwise (VPU)

    # Self-gram |S| @ |S|.T (contract spatial axis of both operands, no transpose
    # materialized, no sublane slicing of the wide tensor).  8x8 f32 result.
    acc_ref[...] += lax.dot_general(s, s, (((1,), (1,)), ((), ())),
                                    preferred_element_type=jnp.float32)

    @pl.when(t == n_t - 1)
    def _():
        # torch.bmm(sx, sy.permute(0,2,1))[b] == |Sx| @ |Sy|.T  == acc[:O, O:].
        out_ref[b] = acc_ref[:O, O:]

        # Fused nn.Softmax(dim=0): once all batch rows are written, finalize in VMEM.
        @pl.when(b == pl.num_programs(0) - 1)
        def _():
            a = out_ref[...]                                 # (B, O, O)
            m = jnp.max(a, axis=0, keepdims=True)
            e = jnp.exp(a - m)
            denom = jnp.sum(e, axis=0, keepdims=True)
            out_ref[...] = e * pl.reciprocal(denom, approx=True)


def sobel_forward(x, weight_x, weight_y, *, max_tile_hw=2048):
    """x: (B, C, H, W) f32; weight_x/weight_y: (O, C, 3, 3) f32. Returns (B, O, O) f32."""
    B, C, H, W = x.shape
    O = weight_x.shape[0]
    assert O == C, "PyTorch module's .view(b, c, -1) requires out_channel == in_channel"
    # TODO(synk): the module's c == 1 branch (view(b, h, -1)) is not implemented here.

    HW = H * W
    HWp = ((HW + 127) // 128) * 128                           # lane-dense spatial axis
    tile_hw = min(HWp, max_tile_hw)                           # multiple of 128
    HWp = ((HWp + tile_hw - 1) // tile_hw) * tile_hw          # multiple of the tile
    n_t = HWp // tile_hw

    # conv2d padding=1 + im2col (wrapper glue, plain JAX).
    xpad = jnp.pad(x, ((0, 0), (0, 0), (1, 1), (1, 1)))
    patches = [xpad[:, :, kh:kh + H, kw:kw + W]               # tap t = kh*3 + kw
               for kh in range(3) for kw in range(3)]
    cols = jnp.stack(patches, axis=1).reshape(B, 9 * C, HW)   # row index = t*C + c
    if HWp != HW:
        cols = jnp.pad(cols, ((0, 0), (0, 0), (0, HWp - HW))) # zero cols -> 0 in Gram
    cols = cols.astype(jnp.bfloat16)

    # Pack both weight sets as one 2-D tile (2*O, 9*C), column index = t*C + c.
    wx = jnp.transpose(weight_x, (0, 2, 3, 1)).reshape(O, 9 * C)
    wy = jnp.transpose(weight_y, (0, 2, 3, 1)).reshape(O, 9 * C)
    wxy = jnp.concatenate([wx, wy], axis=0).astype(jnp.bfloat16)   # exact in bf16

    out = pl.pallas_call(
        _sobel_gram_softmax_kernel,
        out_shape=jax.ShapeDtypeStruct((B, O, O), jnp.float32),
        grid_spec=pltpu.PrefetchScalarGridSpec(
            num_scalar_prefetch=0,
            grid=(B, n_t),                                    # reduction (spatial) axis last
            in_specs=[
                pl.BlockSpec((1, 9 * C, tile_hw), lambda b, t: (b, 0, t)),
                pl.BlockSpec((2 * O, 9 * C), lambda b, t: (0, 0)),
            ],
            # Resident output block across the whole grid (batch softmax fusion).
            out_specs=pl.BlockSpec((B, O, O), lambda b, t: (0, 0, 0)),
            scratch_shapes=[pltpu.VMEM((2 * O, 2 * O), jnp.float32)],
        ),
        compiler_params=pltpu.CompilerParams(
            # Output block is revisited across both axes -> both "arbitrary".
            dimension_semantics=("arbitrary", "arbitrary")),
    )(cols, wxy)
    return out


def sobel_reference(x, weight_x, weight_y):
    """Pure-JAX f32 reference mirroring the PyTorch forward (c != 1 branch)."""
    dn = ("NCHW", "OIHW", "NCHW")
    sx = jnp.abs(lax.conv_general_dilated(
        x, weight_x, (1, 1), ((1, 1), (1, 1)), dimension_numbers=dn))
    sy = jnp.abs(lax.conv_general_dilated(
        x, weight_y, (1, 1), ((1, 1), (1, 1)), dimension_numbers=dn))
    b = x.shape[0]
    sxv = sx.reshape(b, weight_x.shape[0], -1)
    syv = sy.reshape(b, weight_y.shape[0], -1).transpose(0, 2, 1)
    A = jnp.einsum("bij,bjk->bik", sxv, syv)
    return jax.nn.softmax(A, axis=0)


if __name__ == "__main__":
    key = jax.random.PRNGKey(0)
    B, C, H, W = 2, 4, 16, 16
    O = C  # out_channel == in_channel (required by the module's .view(b, c, -1))

    # Feature-map-scale input (keeps the dim-0 softmax in its smooth regime).
    x = 0.05 * jax.random.normal(key, (B, C, H, W), dtype=jnp.float32)

    # Deterministic params: the fixed Sobel kernels expanded to (O, C, 3, 3).
    kx = jnp.array([[-1.0, 0.0, 1.0], [-2.0, 0.0, 2.0], [-1.0, 0.0, 1.0]],
                   dtype=jnp.float32)
    ky = jnp.array([[-1.0, -2.0, -1.0], [0.0, 0.0, 0.0], [1.0, 2.0, 1.0]],
                   dtype=jnp.float32)
    weight_x = jnp.broadcast_to(kx, (O, C, 3, 3)).astype(jnp.float32)
    weight_y = jnp.broadcast_to(ky, (O, C, 3, 3)).astype(jnp.float32)

    out = jax.block_until_ready(sobel_forward(x, weight_x, weight_y))
    ref = jax.block_until_ready(sobel_reference(x, weight_x, weight_y))

    assert out.shape == (B, O, O)
    assert bool(jnp.all(jnp.isfinite(out)))
    # bf16 MXU inputs (f32 accumulation) vs pure-f32 reference -> modest tolerance.
    assert bool(jnp.allclose(out, ref, atol=2e-2, rtol=2e-2))
    print("KERNEL_OK")
</pallas_src>

<mosaic_0001>
module attributes {stable_mosaic.version = 11 : i64} {
  func.func @_sobel_gram_softmax_kernel(%arg0: i32, %arg1: i32, %arg2: memref<1x36x256xbf16, #tpu.memory_space<vmem>>, %arg3: memref<8x36xbf16, #tpu.memory_space<vmem>>, %arg4: memref<2x4x4xf32, #tpu.memory_space<vmem>>, %arg5: memref<8x8xf32, #tpu.memory_space<vmem>>) attributes {dimension_semantics = [#tpu.dimension_semantics<arbitrary>, #tpu.dimension_semantics<arbitrary>], iteration_bounds = array<i64: 2, 1>, scalar_prefetch = 0 : i64, scratch_operands = 1 : i64, tpu.core_type = #tpu.core_type<tc>, window_params = [{transform_indices = @transform_0, window_bounds = array<i64: 1, 36, 256>}, {pipeline_mode = #tpu.pipeline_mode<synchronous>, transform_indices = @transform_1, window_bounds = array<i64: 8, 36>}, {pipeline_mode = #tpu.pipeline_mode<synchronous>, transform_indices = @transform_2, window_bounds = array<i64: 2, 4, 4>}]} {
    %c0_i32 = arith.constant 0 : i32
    %0 = arith.cmpi eq, %arg1, %c0_i32 : i32
    %1 = arith.extui %0 : i1 to i32
    %c0_i32_0 = arith.constant 0 : i32
    %2 = arith.cmpi ne, %1, %c0_i32_0 : i32
    scf.if %2 {
      %cst_12 = arith.constant 0.000000e+00 : f32
      %15 = vector.broadcast %cst_12 : f32 to vector<8x8xf32>
      %c0_13 = arith.constant 0 : index
      %c0_14 = arith.constant 0 : index
      %16 = vector.load %arg5[%c0_13, %c0_14] : memref<8x8xf32, #tpu.memory_space<vmem>>, vector<8x8xf32>
      tpu.vector_store %arg5[%c0_13, %c0_14], %15 {strides = array<i32>} : memref<8x8xf32, #tpu.memory_space<vmem>>, vector<8x8xf32>,
    } else {
    }
    %c0 = arith.constant 0 : index
    %c0_1 = arith.constant 0 : index
    %3 = vector.load %arg3[%c0, %c0_1] : memref<8x36xbf16, #tpu.memory_space<vmem>>, vector<8x36xbf16>
    %c0_2 = arith.constant 0 : index
    %c0_3 = arith.constant 0 : index
    %c0_4 = arith.constant 0 : index
    %4 = vector.load %arg2[%c0_2, %c0_3, %c0_4] : memref<1x36x256xbf16, #tpu.memory_space<vmem>>, vector<1x36x256xbf16>
    %5 = vector.shape_cast %4 : vector<1x36x256xbf16> to vector<36x256xbf16>
    %cst = arith.constant dense<0.000000e+00> : vector<8x256xf32>
    %6 = tpu.matmul %3, %5, %cst {dimension_numbers = #tpu.dot_dimension_numbers<[1], [0], [0], [1], [0, 0, 1, 1], [], []>} : vector<8x36xbf16>, vector<36x256xbf16>, vector<8x256xf32> -> vector<8x256xf32>
    %7 = math.absf %6 : vector<8x256xf32>
    %c0_5 = arith.constant 0 : index
    %c0_6 = arith.constant 0 : index
    %8 = vector.load %arg5[%c0_5, %c0_6] : memref<8x8xf32, #tpu.memory_space<vmem>>, vector<8x8xf32>
    %cst_7 = arith.constant dense<0.000000e+00> : vector<8x8xf32>
    %9 = tpu.matmul %7, %7, %cst_7 {dimension_numbers = #tpu.dot_dimension_numbers<[1], [1], [0], [0], [0, 0, 1, 0], [], []>} : vector<8x256xf32>, vector<8x256xf32>, vector<8x8xf32> -> vector<8x8xf32>
    %10 = arith.addf %8, %9 : vector<8x8xf32>
    %c0_8 = arith.constant 0 : index
    %c0_9 = arith.constant 0 : index
    %11 = vector.load %arg5[%c0_8, %c0_9] : memref<8x8xf32, #tpu.memory_space<vmem>>, vector<8x8xf32>
    tpu.vector_store %arg5[%c0_8, %c0_9], %10 {strides = array<i32>} : memref<8x8xf32, #tpu.memory_space<vmem>>, vector<8x8xf32>,
    %c0_i32_10 = arith.constant 0 : i32
    %12 = arith.cmpi eq, %arg1, %c0_i32_10 : i32
    %13 = arith.extui %12 : i1 to i32
    %c0_i32_11 = arith.constant 0 : i32
    %14 = arith.cmpi ne, %13, %c0_i32_11 : i32
    scf.if %14 {
      %c0_12 = arith.constant 0 : index
      %c4 = arith.constant 4 : index
      %15 = vector.load %arg5[%c0_12, %c4] : memref<8x8xf32, #tpu.memory_space<vmem>>, vector<4x4xf32>
      %16 = arith.index_cast %arg0 : i32 to index
      %c0_13 = arith.constant 0 : index
      %c0_14 = arith.constant 0 : index
      %17 = vector.load %arg4[%16, %c0_13, %c0_14] : memref<2x4x4xf32, #tpu.memory_space<vmem>>, vector<1x4x4xf32>
      %18 = vector.shape_cast %17 : vector<1x4x4xf32> to vector<4x4xf32>
      %19 = vector.shape_cast %15 : vector<4x4xf32> to vector<1x4x4xf32>
      tpu.vector_store %arg4[%16, %c0_13, %c0_14], %19 {strides = array<i32>} : memref<2x4x4xf32, #tpu.memory_space<vmem>>, vector<1x4x4xf32>,
      %c1_i32 = arith.constant 1 : i32
      %20 = arith.cmpi eq, %arg0, %c1_i32 : i32
      %21 = arith.extui %20 : i1 to i32
      %c0_i32_15 = arith.constant 0 : i32
      %22 = arith.cmpi ne, %21, %c0_i32_15 : i32
      scf.if %22 {
        %c0_16 = arith.constant 0 : index
        %c0_17 = arith.constant 0 : index
        %c0_18 = arith.constant 0 : index
        %23 = vector.load %arg4[%c0_16, %c0_17, %c0_18] : memref<2x4x4xf32, #tpu.memory_space<vmem>>, vector<2x4x4xf32>
        %cst_19 = arith.constant dense<0xFF800000> : vector<4x4xf32>
        %24 = vector.multi_reduction <maximumf>, %23, %cst_19 [0] : vector<2x4x4xf32> to vector<4x4xf32>
        %25 = vector.shape_cast %24 : vector<4x4xf32> to vector<1x4x4xf32>
        %26 = vector.broadcast %25 : vector<1x4x4xf32> to vector<2x4x4xf32>
        %27 = arith.subf %23, %26 : vector<2x4x4xf32>
        %28 = math.exp %27 : vector<2x4x4xf32>
        %cst_20 = arith.constant dense<0.000000e+00> : vector<4x4xf32>
        %29 = vector.multi_reduction <add>, %28, %cst_20 [0] : vector<2x4x4xf32> to vector<4x4xf32>
        %30 = vector.shape_cast %29 : vector<4x4xf32> to vector<1x4x4xf32>
        %31 = tpu.reciprocal %30 {approx = true} : vector<1x4x4xf32> -> vector<1x4x4xf32>
        %32 = vector.broadcast %31 : vector<1x4x4xf32> to vector<2x4x4xf32>
        %33 = arith.mulf %28, %32 : vector<2x4x4xf32>
        %c0_21 = arith.constant 0 : index
        %c0_22 = arith.constant 0 : index
        %c0_23 = arith.constant 0 : index
        %34 = vector.load %arg4[%c0_21, %c0_22, %c0_23] : memref<2x4x4xf32, #tpu.memory_space<vmem>>, vector<2x4x4xf32>
        tpu.vector_store %arg4[%c0_21, %c0_22, %c0_23], %33 {strides = array<i32>} : memref<2x4x4xf32, #tpu.memory_space<vmem>>, vector<2x4x4xf32>,
      } else {
      }
    } else {
    }
    return
  }
  func.func @transform_0(%arg0: i32, %arg1: i32) -> (i32, i32, i32) {
    %c0_i32 = arith.constant 0 : i32
    %c0_i32_0 = arith.constant 0 : i32
    return %arg0, %c0_i32, %arg1 : i32, i32, i32
  }
  func.func @transform_1(%arg0: i32, %arg1: i32) -> (i32, i32) {
    %c0_i32 = arith.constant 0 : i32
    %c0_i32_0 = arith.constant 0 : i32
    %c0_i32_1 = arith.constant 0 : i32
    return %c0_i32, %c0_i32_0 : i32, i32
  }
  func.func @transform_2(%arg0: i32, %arg1: i32) -> (i32, i32, i32) {
    %c0_i32 = arith.constant 0 : i32
    %c0_i32_0 = arith.constant 0 : i32
    %c0_i32_1 = arith.constant 0 : i32
    %c0_i32_2 = arith.constant 0 : i32
    return %c0_i32, %c0_i32_0, %c0_i32_1 : i32, i32, i32
  }
}

</mosaic_0001>

<llo_original>
// kernel: tpu_custom_call.1
$region0: #{tpu_custom_call.1}
  #allocation0 [shape = 'u32[]', space=smem, size = 0x4, offset = 0x4, fixed_abs, tag = 'smem constant byte address 0x4 - core index']
  #allocation1 [shape = 'u32[144,128]{1,0:T(1,128)}', space=vmem, size = 0x12000, scoped, tag = 'internal scratch']
  #allocation2 [shape = 'f32[8,8]{1,0:T(8,128)}', space=vmem, size = 0x1000, scoped, tag = 'scratch operand']
  %s0 = inlined_call_operand.vmem [shape: bf16[2,36,256], index: 0, kind: input, shape index: {}]
  %s1 = inlined_call_operand.vmem [shape: bf16[8,36], index: 1, kind: input, shape index: {}]
  %s2 = inlined_call_operand.hbm [shape: f32[2,4,4], index: 2, kind: output, shape index: {}]
  %s3 = sld [smem:[#allocation0]]
  $region53: #{tpu_custom_call.1} parent=0
    _
  %s5 = ssub.s32 1, %s3
  %s6 = scalar_select 0, %s5, %s3
  $region1: #{tpu_custom_call.1} parent=0
    #allocation3 [shape = 'u8[4096]{0}', space=vmem, size = 0x1000, scoped, tag = 'output window, operand 0, single buffered']
    #allocation4 [shape = 's32[2]{0}', space=sflag, size = 0x8, scoped, tag = 'scoped memory for tpu_custom_call.1']
    %7 = vsyncpa [#allocation4], 0
    loop: start=0, step=1, limit=4
    $region2: #{tpu_custom_call.1} parent=1 // loop_pre_header
      _
    $region3: #{tpu_custom_call.1} parent=1 // loop_header
      %s9 = sphi 0, %s13
      %p10 = scmp.ge.s32.totalorder %s9, 4
      %s16 = sphi 0, %s28
      %s17 = sphi 0, %s24
      %s18 = sphi 0, %s16
      %s19 = sphi 0, %s17
      %s20 = sphi 0, %s18
      %s21 = sphi 0, %s19
      %s33 = sphi 0, %s35
      %s36 = sphi 0, %s33
      %s37 = sphi 0, %s36
      %s53 = sphi 0, %s37
      %s57 = sphi 0, %s57
      %s59 = sphi 0, %s57
      %s60 = sphi 0, %s59
      %s74 = sphi 0, %s60
      %s78 = sphi 0, %s78
      %s80 = sphi 0, %s78
      %s81 = sphi 0, %s80
      %s95 = sphi 0, %s81
    $region4: #{tpu_custom_call.1} parent=1 // loop_header_branch
      %12 = sbr.rel (%p10) target = $region8
    $region5: #{tpu_custom_call.1} parent=1 // loop_body
      %s14 = ssub.s32 %s9, 1
      %s15 = ssub.s32 %s9, 2
      %s22 = sadd.s32 1, %s17
      %p23 = scmp.ge.s32.totalorder %s22, 1
      %s24 = scalar_select %p23, 0, %s22
      %s25 = sadd.s32 1, %s16
      %s26 = scalar_select %p23, %s25, %s16
      %p27 = scmp.ge.s32.totalorder %s26, 2
      %s28 = scalar_select %p27, 0, %s26
      %s29 = ssub.s32 %s16, %s28
      %s30 = ssub.s32 %s17, %s24
      %s31 = sor.u32 %s29, %s30
      %p32 = scmp.eq.s32.totalorder %s31, 0
      %s34 = sadd.s32 %s33, 1
      %s35 = scalar_select %p32, %s33, %s34
      %p38 = pneg %p32
      %p39 = scmp.eq.s32.totalorder %s9, 1
      %p40 = por %p38, %p39
      %p41 = scmp.ne.s32.totalorder %s33, %s36
      %p42 = scmp.eq.s32.totalorder %s9, 0
      %p43 = por %p41, %p42
      %p44 = scmp.ne.s32.totalorder %s33, %s36
      %p45 = scmp.eq.s32.totalorder %s14, 1
      %p46 = por %p44, %p45
      %p47 = scmp.ne.s32.totalorder %s36, %s37
      %p48 = scmp.eq.s32.totalorder %s14, 0
      %p49 = por %p47, %p48
      %p50 = scmp.ne.s32.totalorder %s36, %s37
      %p51 = scmp.eq.s32.totalorder %s15, 1
      %p52 = por %p50, %p51
      %p54 = scmp.ne.s32.totalorder %s37, %s53
      %p55 = scmp.eq.s32.totalorder %s15, 0
      %p56 = por %p54, %p55
      %s58 = sadd.s32 %s57, 1
      %p61 = scmp.eq.s32.totalorder %s9, 1
      %p62 = scmp.ne.s32.totalorder %s57, %s59
      %p63 = scmp.eq.s32.totalorder %s9, 0
      %p64 = por %p62, %p63
      %p65 = scmp.ne.s32.totalorder %s57, %s59
      %p66 = scmp.eq.s32.totalorder %s14, 1
      %p67 = por %p65, %p66
      %p68 = scmp.ne.s32.totalorder %s59, %s60
      %p69 = scmp.eq.s32.totalorder %s14, 0
      %p70 = por %p68, %p69
      %p71 = scmp.ne.s32.totalorder %s59, %s60
      %p72 = scmp.eq.s32.totalorder %s15, 1
      %p73 = por %p71, %p72
      %p75 = scmp.ne.s32.totalorder %s60, %s74
      %p76 = scmp.eq.s32.totalorder %s15, 0
      %p77 = por %p75, %p76
      %s79 = sadd.s32 %s78, 1
      %p82 = scmp.eq.s32.totalorder %s9, 1
      %p83 = scmp.ne.s32.totalorder %s78, %s80
      %p84 = scmp.eq.s32.totalorder %s9, 0
      %p85 = por %p83, %p84
      %p86 = scmp.ne.s32.totalorder %s78, %s80
      %p87 = scmp.eq.s32.totalorder %s14, 1
      %p88 = por %p86, %p87
      %p89 = scmp.ne.s32.totalorder %s80, %s81
      %p90 = scmp.eq.s32.totalorder %s14, 0
      %p91 = por %p89, %p90
      %p92 = scmp.ne.s32.totalorder %s80, %s81
      %p93 = scmp.eq.s32.totalorder %s15, 1
      %p94 = por %p92, %p93
      %p96 = scmp.ne.s32.totalorder %s81, %s95
      %p97 = scmp.eq.s32.totalorder %s15, 0
      %p98 = por %p96, %p97
      %p99 = scmp.le.s32.totalorder 1, %s9
      %p100 = scmp.lt.s32.totalorder %s9, 3
      %p101 = pnand %p99, %p100
      %p102 = pneg %p101
      // Predicated region
      $region9: #{tpu_custom_call.1} parent=5 // pred_check
        _
      $region10: #{tpu_custom_call.1} parent=5 // pred_check_branch
        %104 = sbr.rel (%p101) target = $region12
      $region11: #{tpu_custom_call.1} parent=5 // pred_region
        %s105 = ssub.s32 %s9, 1
        // Predicated region
        $region13: #{tpu_custom_call.1} parent=11 // pred_check
          %p106 = pneg %p70
        $region14: #{tpu_custom_call.1} parent=11 // pred_check_branch
          %108 = sbr.rel (%p106) target = $region16
        $region15: #{tpu_custom_call.1} parent=11 // pred_region
          _
        $region16: #{tpu_custom_call.1} parent=11 // pred_fallthru
          _
      $region12: #{tpu_custom_call.1} parent=5 // pred_fallthru
        _
      %p109 = scmp.lt.s32.totalorder %s9, 2
      // Predicated region
      $region17: #{tpu_custom_call.1} parent=5 // pred_check
        %p110 = pneg %p109
      $region18: #{tpu_custom_call.1} parent=5 // pred_check_branch
        %112 = sbr.rel (%p110) target = $region20
      $region19: #{tpu_custom_call.1} parent=5 // pred_region
        // Predicated region
        $region21: #{tpu_custom_call.1} parent=19 // pred_check
          %p113 = pneg %p43
        $region22: #{tpu_custom_call.1} parent=19 // pred_check_branch
          %115 = sbr.rel (%p113) target = $region24
        $region23: #{tpu_custom_call.1} parent=19 // pred_region
          %s116 = smul.u32 2, %s17
          %p117 = scmp.lt.s32.totalorder %s16, 1
          %s118 = scalar_select %p117, %s16, 1
          %p119 = scmp.lt.s32.totalorder %s116, 1
          %s120 = scalar_select %p119, %s116, 1
          %s121 = smul.addr %s118, 10
          %s122 = sadd.s32 %s120, %s121
          %s123 = smul.addr %s122, 4
          %s124 = scalar_lea.vmem %s0, %s123
          %s125 = smul.u32 2, %s17
        $region24: #{tpu_custom_call.1} parent=19 // pred_fallthru
          _
      $region20: #{tpu_custom_call.1} parent=5 // pred_fallthru
        _
      %p126 = scmp.le.s32.totalorder 1, %s9
      %p127 = scmp.lt.s32.totalorder %s9, 3
      %p128 = pnand %p126, %p127
      %p129 = pneg %p128
      // Predicated region
      $region25: #{tpu_custom_call.1} parent=5 // pred_check
        _
      $region26: #{tpu_custom_call.1} parent=5 // pred_check_branch
        %131 = sbr.rel (%p128) target = $region28
      $region27: #{tpu_custom_call.1} parent=5 // pred_region
        %s132 = ssub.s32 %s9, 1
        %s133 = smul.u32 2, %s19
        %p134 = scmp.lt.s32.totalorder %s18, 1
        %s135 = scalar_select %p134, %s18, 1
        %p136 = scmp.lt.s32.totalorder %s133, 1
        %s137 = scalar_select %p136, %s133, 1
        %s138 = smul.addr %s135, 10
        %s139 = sadd.s32 %s137, %s138
        %s140 = smul.addr %s139, 4
        %s141 = scalar_lea.vmem %s0, %s140
        %p142 = pneg %p49
        %p143 = pneg %p46
        %p144 = pneg %p70
        %p145 = pneg %p67
        %p146 = pneg %p91
        %p147 = pneg %p88
        %s148 = smul.u32 2, %s19
        %p149 = scmp.lt.s32.totalorder %s18, 1
        %s150 = scalar_select %p149, %s18, 1
        %p151 = scmp.lt.s32.totalorder %s148, 1
        %s152 = scalar_select %p151, %s148, 1
        %s153 = smul.addr %s150, 10
        %s154 = sadd.s32 %s152, %s153
        %s155 = smul.addr %s154, 4
        %s156 = scalar_lea.vmem %s0, %s155
        %s157 = smul.u32 2, %s19
        %p159 = scmp.eq.s32.totalorder %s19, 0
        // Predicated region
        $region29: #{tpu_custom_call.1} parent=27 // pred_check
          %p160 = pneg %p159
        $region30: #{tpu_custom_call.1} parent=27 // pred_check_branch
          %162 = sbr.rel (%p160) target = $region32
        $region31: #{tpu_custom_call.1} parent=27 // pred_region
          %vm163 = vcmask 64512
          %164 = vst.msk [vmem:[#allocation2] sm:$0xff] %vm163, 0.0
        $region32: #{tpu_custom_call.1} parent=27 // pred_fallthru
          _
        %v165 = vld [vmem:[%s1] sm:$0xf]
        %v166 = vld [vmem:[%s156] sm:$0xff]
        %v167 = vld [vmem:[%s156 + $0x8] sm:$0xff]
        %v168 = vld [vmem:[%s156 + $0x10] sm:$0xff]
        %v169 = vld [vmem:[%s156 + $0x18] sm:$0xff]
        %v170 = vld [vmem:[%s156 + $0x20] sm:$0x33]
        %v176 = vunpack.c.l.b16 %v166
        %v177 = vunpack.c.h.b16 %v166
        %v178 = vunpack.c.l.b16 %v167
        %v179 = vunpack.c.h.b16 %v167
        %v180 = vunpack.c.l.b16 %v168
        %v181 = vunpack.c.h.b16 %v168
        %v182 = vunpack.c.l.b16 %v169
        %v183 = vunpack.c.h.b16 %v169
        %v184 = vunpack.c.l.b16 %v170
        %v185 = vunpack.c.h.b16 %v170
        %v186 = vpack.c.b16 %v178, %v176
        %v187 = vpack.c.b16 %v179, %v177
        %v188 = vpack.c.b16 %v182, %v180
        %v189 = vpack.c.b16 %v183, %v181
        %v190 = vpack.c.b16 %v184, %v184
        %v191 = vpack.c.b16 %v185, %v185
        %vm196 = vcmask 293888
        %v198 = vsel %vm196, %v165, 0
        %vm200 = vcmask 1041408
        %v202 = vsel %vm200, %v190, 0
        %v205 = vsel %vm200, %v191, 0
        %207 = vmatprep.subr.bf16.mxu0 0
        %208 = vmatpush1.bf16.msra.mxu0 0
        %209 = vmatprep.subr.bf16.mxu0 0
        %210 = vmatpush1.bf16.msra.mxu0 0
        %211 = vmatprep.subr.bf16.mxu0 0
        %212 = vmatpush1.bf16.msra.mxu0 0
        %213 = vmatprep.subr.bf16.mxu0 0
        %214 = vmatpush1.bf16.msra.mxu0 0
        %215 = vmatprep.subr.bf16.mxu0 0
        %216 = vmatpush1.bf16.msra.mxu0 0
        %217 = vmatprep.subr.bf16.mxu0 %v205
        %218 = vmatpush1.bf16.msra.mxu0 %v202
        %219 = vmatprep.subr.bf16.mxu0 %v189
        %220 = vmatpush1.bf16.msra.mxu0 %v188
        %221 = vmatprep.subr.bf16.mxu0 %v187
        %222 = vmatpush1.bf16.msra.mxu0 %v186
        %223 = vmatprep.subr.bf16.mxu0 0
        %224 = vmatpush2.bf16.msra.mxu0 0
        %225 = vmatprep.subr.bf16.mxu0 0
        %226 = vmatpush2.bf16.msra.mxu0 0
        %227 = vmatprep.subr.bf16.mxu0 0
        %228 = vmatpush2.bf16.msra.mxu0 0
        %229 = vmatprep.subr.bf16.mxu0 0
        %230 = vmatpush2.bf16.msra.mxu0 0
        %231 = vmatprep.subr.bf16.mxu0 0
        %232 = vmatpush2.bf16.msra.mxu0 0
        %233 = vmatprep.subr.bf16.mxu0 0
        %234 = vmatpush2.bf16.msra.mxu0 0
        %235 = vmatprep.subr.bf16.mxu0 0
        %236 = vmatpush2.bf16.msra.mxu0 0
        %237 = vmatprep.subr.bf16.mxu0 0
        %238 = vmatpush2.bf16.msra.mxu0 0
        %239 = vmatprep.mubr.bf16.mxu0 0
        %240 = vmatmul.mubr.bf16.gmra.mxu0 %v198
        %v241 = vpop.f32.mrf.mxu0
        %v242 = vadd.f32 0.0, %v241
        %v243 = vpop.f32.mrf.mxu0
        %v244 = vadd.f32 0.0, %v243
        %v245 = vpop.f32.mrf.mxu0
        %v246 = vpop.f32.mrf.mxu0
        %247 = vdwg.mxu0
        %v248 = vand.u32 2147483647, %v242
        %v249 = vand.u32 2147483647, %v244
        %v250 = vld [vmem:[#allocation2] sm:$0xff]
        %251 = vmatprep.subr.mxu0 0.0
        %252 = vmatpush1.xpose.msra.mxu0 0.0
        %253 = vmatprep.subr.mxu0 0.0
        %254 = vmatpush1.xpose.msra.mxu0 0.0
        %255 = vmatprep.subr.mxu0 0.0
        %256 = vmatpush1.xpose.msra.mxu0 0.0
        %257 = vmatprep.subr.mxu0 0.0
        %258 = vmatpush1.xpose.msra.mxu0 0.0
        %259 = vmatprep.subr.mxu0 0.0
        %260 = vmatpush1.xpose.msra.mxu0 0.0
        %261 = vmatprep.subr.mxu0 0.0
        %262 = vmatpush1.xpose.msra.mxu0 0.0
        %263 = vmatprep.subr.mxu0 0.0
        %264 = vmatpush1.xpose.msra.mxu0 0.0
        %265 = vmatprep.subr.mxu0 0.0
        %266 = vmatpush1.xpose.msra.mxu0 0.0
        %267 = vmatprep.subr.mxu0 0.0
        %268 = vmatpush1.xpose.msra.mxu0 0.0
        %269 = vmatprep.subr.mxu0 0.0
        %270 = vmatpush1.xpose.msra.mxu0 0.0
        %271 = vmatprep.subr.mxu0 0.0
        %272 = vmatpush1.xpose.msra.mxu0 0.0
        %273 = vmatprep.subr.mxu0 0.0
        %274 = vmatpush1.xpose.msra.mxu0 0.0
        %275 = vmatprep.subr.mxu0 0.0
        %276 = vmatpush1.xpose.msra.mxu0 0.0
        %277 = vmatprep.subr.mxu0 0.0
        %278 = vmatpush1.xpose.msra.mxu0 0.0
        %279 = vmatprep.subr.mxu0 0.0
        %280 = vmatpush1.xpose.msra.mxu0 0.0
        %281 = vmatprep.subr.mxu0 %v249
        %282 = vmatpush1.xpose.msra.mxu0 %v248
        %283 = vmatprep.subr.mxu0 0.0
        %284 = vmatpush2.xpose.msra.mxu0 0.0
        %285 = vmatprep.subr.mxu0 0.0
        %286 = vmatpush2.xpose.msra.mxu0 0.0
        %287 = vmatprep.subr.mxu0 0.0
        %288 = vmatpush2.xpose.msra.mxu0 0.0
        %289 = vmatprep.subr.mxu0 0.0
        %290 = vmatpush2.xpose.msra.mxu0 0.0
        %291 = vmatprep.subr.mxu0 0.0
        %292 = vmatpush2.xpose.msra.mxu0 0.0
        %293 = vmatprep.subr.mxu0 0.0
        %294 = vmatpush2.xpose.msra.mxu0 0.0
        %295 = vmatprep.subr.mxu0 0.0
        %296 = vmatpush2.xpose.msra.mxu0 0.0
        %297 = vmatprep.subr.mxu0 0.0
        %298 = vmatpush2.xpose.msra.mxu0 0.0
        %299 = vmatprep.subr.mxu0 0.0
        %300 = vmatpush2.xpose.msra.mxu0 0.0
        %301 = vmatprep.subr.mxu0 0.0
        %302 = vmatpush2.xpose.msra.mxu0 0.0
        %303 = vmatprep.subr.mxu0 0.0
        %304 = vmatpush2.xpose.msra.mxu0 0.0
        %305 = vmatprep.subr.mxu0 0.0
        %306 = vmatpush2.xpose.msra.mxu0 0.0
        %307 = vmatprep.subr.mxu0 0.0
        %308 = vmatpush2.xpose.msra.mxu0 0.0
        %309 = vmatprep.subr.mxu0 0.0
        %310 = vmatpush2.xpose.msra.mxu0 0.0
        %311 = vmatprep.subr.mxu0 0.0
        %312 = vmatpush2.xpose.msra.mxu0 0.0
        %313 = vmatprep.subr.mxu0 0.0
        %314 = vmatpush2.xpose.msra.mxu0 0.0
        %315 = vmatprep.mubr.f32.mxu0 %v249
        %316 = vmatmul.mubr.f32.gmra.mxu0 %v248
        %v317 = vpop.f32.mrf.mxu0
        %v318 = vadd.f32 0.0, %v317
        %v319 = vpop.f32.mrf.mxu0
        %320 = vdwg.mxu0
        %v321 = vadd.f32 %v250, %v318
        %vm322 = vcmask 64512
        %323 = vst.msk [vmem:[#allocation2] sm:$0xff] %vm322, %v321
        // Predicated region
        $region33: #{tpu_custom_call.1} parent=27 // pred_check
          %p324 = pneg %p159
        $region34: #{tpu_custom_call.1} parent=27 // pred_check_branch
          %326 = sbr.rel (%p324) target = $region36
        $region35: #{tpu_custom_call.1} parent=27 // pred_region
          %v327 = vld [vmem:[#allocation2] sm:$0xf]
          %329 = vrot.lane.b32.xlu0 %v327, 124
          %v330 = vpop.permute.xlu0 %329
          %s332 = smul.u32 %s18, 4
          %s333 = scalar_lea.vmem [#allocation3], %s332
          %vm334 = vcmask 27648
          %335 = vst.msk [vmem:[%s333] sm:$0xf] %vm334, %v330
          %p336 = scmp.eq.s32.totalorder %s18, 1
          // Predicated region
          $region37: #{tpu_custom_call.1} parent=35 // pred_check
            %p337 = pneg %p336
          $region38: #{tpu_custom_call.1} parent=35 // pred_check_branch
            %339 = sbr.rel (%p337) target = $region40
          $region39: #{tpu_custom_call.1} parent=35 // pred_region
            %v340 = vld [vmem:[#allocation3] sm:$0xf]
            %v341 = vld [vmem:[#allocation3 + $0x4] sm:$0xf]
            %v342 = vsel %vm334, %v340, -inf
            %v343 = vsel %vm334, %v341, -inf
            %v344 = vmax.f32 %v342, %v343
            %v345 = vsub.f32 %v340, %v344
            %v346 = vsub.f32 %v341, %v344
            %v347 = vmul.f32 %v345, 1.442695
            %v348 = vpow.pop %v347
            %v349 = vmul.f32 %v346, 1.442695
            %v350 = vpow.pop %v349
            %v351 = vsel %vm334, %v348, 0.0
            %v352 = vsel %vm334, %v350, 0.0
            %v353 = vadd.f32 %v351, %v352
            %v354 = vrcp.pop %v353
            %v355 = vmul.f32 %v348, %v354
            %v356 = vmul.f32 %v350, %v354
            %357 = vst.msk [vmem:[#allocation3] sm:$0xf] %vm334, %v355
            %358 = vst.msk [vmem:[#allocation3 + $0x4] sm:$0xf] %vm334, %v356
          $region40: #{tpu_custom_call.1} parent=35 // pred_fallthru
            _
        $region36: #{tpu_custom_call.1} parent=27 // pred_fallthru
          _
        // Predicated region
        $region41: #{tpu_custom_call.1} parent=27 // pred_check
          %p359 = pneg %p88
        $region42: #{tpu_custom_call.1} parent=27 // pred_check_branch
          %361 = sbr.rel (%p359) target = $region44
        $region43: #{tpu_custom_call.1} parent=27 // pred_region
          %s363 = ssub.s32 128, 128
          %364 = vsyncadd [#allocation4], %s363
          %s365 = sshll.u32 [#allocation3], 4
          %s366 = int_to_ptr.vmem [resolvable:$true] %s365
          %371 = dma.vmem_to_hbm [thread:$0]  %s366, 128, %s2, [#allocation4], 64, 64, 4
        $region44: #{tpu_custom_call.1} parent=27 // pred_fallthru
          _
        // Predicated region
        $region45: #{tpu_custom_call.1} parent=27 // pred_check
          %p372 = pneg %p88
        $region46: #{tpu_custom_call.1} parent=27 // pred_check_branch
          %374 = sbr.rel (%p372) target = $region48
        $region47: #{tpu_custom_call.1} parent=27 // pred_region
          %375 = dma.done [#allocation4], 128
        $region48: #{tpu_custom_call.1} parent=27 // pred_fallthru
          _
      $region28: #{tpu_custom_call.1} parent=5 // pred_fallthru
        _
      %p376 = scmp.le.s32.totalorder 2, %s9
      // Predicated region
      $region49: #{tpu_custom_call.1} parent=5 // pred_check
        %p377 = pneg %p376
      $region50: #{tpu_custom_call.1} parent=5 // pred_check_branch
        %379 = sbr.rel (%p377) target = $region52
      $region51: #{tpu_custom_call.1} parent=5 // pred_region
        %s380 = ssub.s32 %s9, 2
      $region52: #{tpu_custom_call.1} parent=5 // pred_fallthru
        _
    $region6: #{tpu_custom_call.1} parent=1 // loop_footer
      %s13 = sadd.s32 1, %s9
    $region7: #{tpu_custom_call.1} parent=1 // loop_footer_branch
      %8 = sbr.rel target = $region3
    $region8: #{tpu_custom_call.1} parent=1 // loop_exit
      _
    %381 = vsyncpa [#allocation4], 1
    %s382 = scalar_lea.sflag [#allocation4], 1
    %383 = vsyncpa %s382, 1

</llo_original>
